<compile_context>
chip_gen: v6e
topology: v6e:2x2x1
jax: 0.10.0
libtpu: 0.0.40
codegen_flags: <defaults>
</compile_context>

<pallas_src>
import functools

import jax
import jax.numpy as jnp
from jax.experimental import pallas as pl
from jax.experimental.pallas import tpu as pltpu


# ----------------------------------------------------------------------------
# Buffer construction (deterministic __init__ glue, plain JAX)
# ----------------------------------------------------------------------------
def make_positional_encoding(d_model: int, max_len: int = 5000) -> jnp.ndarray:
    """Returns pe of shape (max_len, 1, d_model), float32 (matches the module)."""
    position = jnp.arange(0, max_len, dtype=jnp.float32)[:, None]          # (L, 1)
    div_term = jnp.exp(
        jnp.arange(0, d_model, 2, dtype=jnp.float32)
        * (-jnp.log(jnp.float32(10000.0)) / d_model)
    )                                                                       # (ceil(D/2),)
    angles = position * div_term                                            # (L, ceil(D/2))
    pe = jnp.zeros((max_len, d_model), dtype=jnp.float32)
    pe = pe.at[:, 0::2].set(jnp.sin(angles))
    if d_model % 2 == 1:
        pe = pe.at[:, 1::2].set(jnp.cos(position * div_term[:-1]))
    else:
        pe = pe.at[:, 1::2].set(jnp.cos(angles))
    return pe[:, None, :]                                                   # (L, 1, D)


# ----------------------------------------------------------------------------
# Pallas kernels (operate on flattened (rows=S*B, D) tiles)
# ----------------------------------------------------------------------------
def _add_pe_kernel(x_ref, pe_ref, o_ref, *, batch: int):
    # x_ref: (tile_s*B, D); pe_ref: (tile_s, D).
    # Broadcast each pe row across the batch (rows are laid out s-major, b-minor).
    pe_rows = jnp.repeat(pe_ref[...], batch, axis=0).astype(x_ref.dtype)
    o_ref[...] = x_ref[...] + pe_rows


def _add_pe_dropout_kernel(x_ref, pe_ref, mask_ref, o_ref, *, batch: int):
    # mask_ref holds 0 or 1/(1-p): inverted dropout is a single multiply.
    pe_rows = jnp.repeat(pe_ref[...], batch, axis=0).astype(x_ref.dtype)
    o_ref[...] = (x_ref[...] + pe_rows) * mask_ref[...]


# ----------------------------------------------------------------------------
# Wrapper
# ----------------------------------------------------------------------------
def _choose_tile_s(S: int, B: int, D: int, dtype_bytes: int,
                   target_block_bytes: int = 2 << 20) -> int:
    """Rows of S per tile; multiple of 8 (sublane-aligned) or the full extent."""
    rows = max(1, target_block_bytes // max(1, B * D * dtype_bytes))
    tile_s = max(8, (rows // 8) * 8)
    tile_s = min(tile_s, S)
    if tile_s % 8 != 0:          # only when S itself is small / not 8-aligned
        tile_s = S               # single full-extent block (always legal)
    return tile_s


def positional_encoding_forward(
    x: jnp.ndarray,
    pe: jnp.ndarray,
    *,
    dropout_p: float = 0.1,
    training: bool = False,
    rng_key=None,
    vmem_limit_bytes: int | None = None,
) -> jnp.ndarray:
    """x: (S, B, D); pe: (max_len, 1, D) float32.  Returns (S, B, D)."""
    S, B, D = x.shape
    dtype_bytes = jnp.dtype(x.dtype).itemsize

    pe2 = pe[:S, 0, :]                  # (S, D) buffer slice — init glue
    x2 = x.reshape(S * B, D)            # contiguous view: sublane-dense rows

    tile_s = _choose_tile_s(S, B, D, dtype_bytes)
    grid = (pl.cdiv(S, tile_s),)

    x_spec = pl.BlockSpec((tile_s * B, D), lambda i: (i, 0))
    pe_spec = pl.BlockSpec((tile_s, D), lambda i: (i, 0))
    mask_spec = pl.BlockSpec((tile_s * B, D), lambda i: (i, 0))
    o_spec = pl.BlockSpec((tile_s * B, D), lambda i: (i, 0))
    out_shape = jax.ShapeDtypeStruct((S * B, D), x.dtype)

    compiler_params = pltpu.CompilerParams(
        dimension_semantics=("parallel",),      # shard S-tiles across TCs (v7x)
        vmem_limit_bytes=vmem_limit_bytes,      # raise for bigger tiles on v6e
    )

    if (not training) or dropout_p == 0.0:
        # Eval mode: dropout is identity (matches nn.Dropout in eval()).
        cost = pl.CostEstimate(
            flops=S * B * D,
            transcendentals=0,
            bytes_accessed=2 * S * B * D * dtype_bytes + S * D * 4,
        )
        out2 = pl.pallas_call(
            functools.partial(_add_pe_kernel, batch=B),
            out_shape=out_shape,
            grid=grid,
            in_specs=[x_spec, pe_spec],
            out_specs=o_spec,
            compiler_params=compiler_params,
            cost_estimate=cost,
        )(x2, pe2)
        return out2.reshape(S, B, D)

    # Training mode: inverted dropout.  Mask generated with stateless jax.random
    # (portable); applied in-kernel with one multiply per element.
    if rng_key is None:
        rng_key = jax.random.PRNGKey(0)
    keep = jax.random.bernoulli(rng_key, p=1.0 - dropout_p, shape=(S * B, D))
    mask = jnp.where(keep, 1.0 / (1.0 - dropout_p), 0.0).astype(x.dtype)

    cost = pl.CostEstimate(
        flops=2 * S * B * D,
        transcendentals=0,
        bytes_accessed=3 * S * B * D * dtype_bytes + S * D * 4,
    )
    out2 = pl.pallas_call(
        functools.partial(_add_pe_dropout_kernel, batch=B),
        out_shape=out_shape,
        grid=grid,
        in_specs=[x_spec, pe_spec, mask_spec],
        out_specs=o_spec,
        compiler_params=compiler_params,
        cost_estimate=cost,
    )(x2, pe2, mask)
    return out2.reshape(S, B, D)


# ----------------------------------------------------------------------------
# Demo / smoke test
# ----------------------------------------------------------------------------
if __name__ == "__main__":
    S, B, D = 8, 2, 32          # seq=8, batch=2, d_model=32
    MAX_LEN = 64                # small max_len for the demo (module default 5000)

    key = jax.random.PRNGKey(0)
    x_key, drop_key = jax.random.split(key)
    x = jax.random.normal(x_key, (S, B, D), dtype=jnp.float32)
    pe = make_positional_encoding(D, MAX_LEN)

    # Eval-mode forward (deterministic): y = x + pe[:S]
    y = positional_encoding_forward(x, pe, dropout_p=0.1, training=False)
    y = jax.block_until_ready(y)
    y_ref = x + pe[:S]
    assert jnp.allclose(y, y_ref, atol=1e-6), "eval-mode mismatch vs reference"

    # Training-mode forward: every output element must be either 0 (dropped)
    # or (x + pe) / (1 - p) (kept, inverted-dropout scaled).
    p = 0.1
    y_train = positional_encoding_forward(
        x, pe, dropout_p=p, training=True, rng_key=drop_key
    )
    y_train = jax.block_until_ready(y_train)
    scaled = y_ref / (1.0 - p)
    ok = jnp.all(
        jnp.isclose(y_train, 0.0, atol=1e-6) | jnp.isclose(y_train, scaled, atol=1e-5)
    )
    assert bool(ok), "training-mode values must be 0 or (x+pe)/(1-p)"

    print("KERNEL_OK")
</pallas_src>

<mosaic_0001>
module attributes {stable_mosaic.version = 11 : i64} {
  func.func @_add_pe_kernel(%arg0: i32, %arg1: memref<16x32xf32, #tpu.memory_space<vmem>>, %arg2: memref<8x32xf32, #tpu.memory_space<vmem>>, %arg3: memref<16x32xf32, #tpu.memory_space<vmem>>) attributes {dimension_semantics = [#tpu.dimension_semantics<parallel>], iteration_bounds = array<i64: 1>, scalar_prefetch = 0 : i64, scratch_operands = 0 : i64, tpu.core_type = #tpu.core_type<tc>, window_params = [{transform_indices = @transform_0, window_bounds = array<i64: 16, 32>}, {transform_indices = @transform_1, window_bounds = array<i64: 8, 32>}, {transform_indices = @transform_2, window_bounds = array<i64: 16, 32>}]} {
    %c0 = arith.constant 0 : index
    %c0_0 = arith.constant 0 : index
    %0 = vector.load %arg2[%c0, %c0_0] : memref<8x32xf32, #tpu.memory_space<vmem>>, vector<8x32xf32>
    %1 = vector.shape_cast %0 : vector<8x32xf32> to vector<8x1x32xf32>
    %2 = vector.broadcast %1 : vector<8x1x32xf32> to vector<8x2x32xf32>
    %3 = vector.shape_cast %2 : vector<8x2x32xf32> to vector<16x32xf32>
    %c0_1 = arith.constant 0 : index
    %c0_2 = arith.constant 0 : index
    %4 = vector.load %arg1[%c0_1, %c0_2] : memref<16x32xf32, #tpu.memory_space<vmem>>, vector<16x32xf32>
    %5 = arith.addf %4, %3 : vector<16x32xf32>
    %c0_3 = arith.constant 0 : index
    %c0_4 = arith.constant 0 : index
    %6 = vector.load %arg3[%c0_3, %c0_4] : memref<16x32xf32, #tpu.memory_space<vmem>>, vector<16x32xf32>
    tpu.vector_store %arg3[%c0_3, %c0_4], %5 {strides = array<i32>} : memref<16x32xf32, #tpu.memory_space<vmem>>, vector<16x32xf32>,
    return
  }
  func.func @transform_0(%arg0: i32) -> (i32, i32) {
    %c0_i32 = arith.constant 0 : i32
    %c0_i32_0 = arith.constant 0 : i32
    return %arg0, %c0_i32 : i32, i32
  }
  func.func @transform_1(%arg0: i32) -> (i32, i32) {
    %c0_i32 = arith.constant 0 : i32
    %c0_i32_0 = arith.constant 0 : i32
    return %arg0, %c0_i32 : i32, i32
  }
  func.func @transform_2(%arg0: i32) -> (i32, i32) {
    %c0_i32 = arith.constant 0 : i32
    %c0_i32_0 = arith.constant 0 : i32
    return %arg0, %c0_i32 : i32, i32
  }
}

</mosaic_0001>

<llo_original>
// kernel: tpu_custom_call.1
$region0: #{tpu_custom_call.1}
  #allocation0 [shape = 'u32[]', space=smem, size = 0x4, offset = 0x4, fixed_abs, tag = 'smem constant byte address 0x4 - core index']
  #allocation1 [shape = 'u32[144,128]{1,0:T(1,128)}', space=vmem, size = 0x12000, scoped, tag = 'internal scratch']
  %s0 = inlined_call_operand.hbm [shape: f32[16,32], index: 0, kind: input, shape index: {}]
  %s1 = inlined_call_operand.hbm [shape: f32[8,32], index: 1, kind: input, shape index: {}]
  %s2 = inlined_call_operand.hbm [shape: f32[16,32], index: 2, kind: output, shape index: {}]
  %s3 = sld [smem:[#allocation0]]
  $region26: #{tpu_custom_call.1} parent=0
    _
  %s5 = ssub.s32 1, %s3
  %s6 = scalar_select 0, %s5, %s3
  $region1: #{tpu_custom_call.1} parent=0
    #allocation2 [shape = 'u8[8192]{0}', space=vmem, size = 0x2000, scoped, tag = 'input window, operand 0, single buffered']
    #allocation3 [shape = 's32[1]{0}', space=sflag, size = 0x4, scoped, tag = 'scoped memory for tpu_custom_call.1']
    #allocation4 [shape = 's32[1]{0}', space=sflag, size = 0x4, scoped, tag = 'scoped memory for tpu_custom_call.1']
    #allocation5 [shape = 'u8[4096]{0}', space=vmem, size = 0x1000, scoped, tag = 'input window, operand 1, single buffered']
    #allocation6 [shape = 's32[1]{0}', space=sflag, size = 0x4, scoped, tag = 'scoped memory for tpu_custom_call.1']
    #allocation7 [shape = 'u8[8192]{0}', space=vmem, size = 0x2000, scoped, tag = 'output window, operand 0, single buffered']
    %7 = vsyncpa [#allocation3], 0
    %8 = vsyncpa [#allocation6], 0
    %9 = vsyncpa [#allocation4], 0
    // Predicated region
    $region2: #{tpu_custom_call.1} parent=1 // pred_check
      _
    $region3: #{tpu_custom_call.1} parent=1 // pred_check_branch
      %11 = sbr.rel (0) target = $region5
    $region4: #{tpu_custom_call.1} parent=1 // pred_region
      %s13 = ssub.s32 256, 256
      %14 = vsyncadd [#allocation3], %s13
      %s15 = sshll.u32 [#allocation2], 4
      %s16 = int_to_ptr.vmem [resolvable:$true] %s15
      %21 = dma.hbm_to_vmem [thread:$0]  %s0, 256, %s16, [#allocation3], 128, 128, 8
    $region5: #{tpu_custom_call.1} parent=1 // pred_fallthru
      _
    // Predicated region
    $region6: #{tpu_custom_call.1} parent=1 // pred_check
      _
    $region7: #{tpu_custom_call.1} parent=1 // pred_check_branch
      %23 = sbr.rel (0) target = $region9
    $region8: #{tpu_custom_call.1} parent=1 // pred_region
      %s25 = ssub.s32 128, 128
      %26 = vsyncadd [#allocation6], %s25
      %s28 = sshll.u32 [#allocation5], 4
      %s29 = int_to_ptr.vmem [resolvable:$true] %s28
      %31 = dma.hbm_to_vmem [thread:$0]  %s1, 128, %s29, [#allocation6]
    $region9: #{tpu_custom_call.1} parent=1 // pred_fallthru
      _
    // Predicated region
    $region10: #{tpu_custom_call.1} parent=1 // pred_check
      _
    $region11: #{tpu_custom_call.1} parent=1 // pred_check_branch
      %33 = sbr.rel (0) target = $region13
    $region12: #{tpu_custom_call.1} parent=1 // pred_region
      %34 = dma.done [#allocation3], 256
    $region13: #{tpu_custom_call.1} parent=1 // pred_fallthru
      _
    // Predicated region
    $region14: #{tpu_custom_call.1} parent=1 // pred_check
      _
    $region15: #{tpu_custom_call.1} parent=1 // pred_check_branch
      %36 = sbr.rel (0) target = $region17
    $region16: #{tpu_custom_call.1} parent=1 // pred_region
      %37 = dma.done [#allocation6], 128
    $region17: #{tpu_custom_call.1} parent=1 // pred_fallthru
      _
    %v38 = vld [vmem:[#allocation5] sm:$0xff]
    %v40 = vcombine.high %v38, %v38
    %v42 = vunpack.c.l.s4 1966171168
    %v43 = vunpack.c.0.s8 %v42
    %v44 = vlaneseq
    %v45 = vshrl.u32 %v44, 7
    %v46 = vsub.s32 %v43, %v45
    %v47 = vrot.slane %v38, %v46
    %v49 = vunpack.c.l.s4 1966171168
    %v50 = vunpack.c.0.s8 %v49
    %v51 = vlaneseq
    %v52 = vshrl.u32 %v51, 7
    %v53 = vsub.s32 %v50, %v52
    %v54 = vrot.slane %v40, %v53
    %v55 = vcombine.high %v47, %v47
    %v56 = vcombine.high %v54, %v54
    %v58 = vunpack.c.l.s4 1966171168
    %v59 = vunpack.c.0.s8 %v58
    %v60 = vlaneseq
    %v61 = vshrl.u32 %v60, 7
    %v62 = vsub.s32 %v59, %v61
    %v63 = vrot.slane %v47, %v62
    %v65 = vunpack.c.l.s4 1966171168
    %v66 = vunpack.c.0.s8 %v65
    %v67 = vlaneseq
    %v68 = vshrl.u32 %v67, 7
    %v69 = vsub.s32 %v66, %v68
    %v70 = vrot.slane %v54, %v69
    %v72 = vunpack.c.l.s4 1966171168
    %v73 = vunpack.c.0.s8 %v72
    %v74 = vlaneseq
    %v75 = vshrl.u32 %v74, 7
    %v76 = vsub.s32 %v73, %v75
    %v77 = vrot.slane %v55, %v76
    %v79 = vunpack.c.l.s4 1966171168
    %v80 = vunpack.c.0.s8 %v79
    %v81 = vlaneseq
    %v82 = vshrl.u32 %v81, 7
    %v83 = vsub.s32 %v80, %v82
    %v84 = vrot.slane %v56, %v83
    %v85 = vcombine.high %v63, %v63
    %v86 = vcombine.high %v70, %v70
    %v87 = vcombine.high %v77, %v77
    %v88 = vcombine.high %v84, %v84
    %v89 = vlaneseq
    %v90 = vshrl.u32 %v89, 7
    %v91 = vsub.s32 0, %v90
    %v92 = vrot.slane %v63, %v91
    %v93 = vlaneseq
    %v94 = vshrl.u32 %v93, 7
    %v95 = vsub.s32 0, %v94
    %v96 = vrot.slane %v77, %v95
    %v97 = vlaneseq
    %v98 = vshrl.u32 %v97, 7
    %v99 = vsub.s32 0, %v98
    %v100 = vrot.slane %v85, %v99
    %v101 = vlaneseq
    %v102 = vshrl.u32 %v101, 7
    %v103 = vsub.s32 0, %v102
    %v104 = vrot.slane %v87, %v103
    %v105 = vlaneseq
    %v106 = vshrl.u32 %v105, 7
    %v107 = vsub.s32 0, %v106
    %v108 = vrot.slane %v70, %v107
    %v109 = vlaneseq
    %v110 = vshrl.u32 %v109, 7
    %v111 = vsub.s32 0, %v110
    %v112 = vrot.slane %v84, %v111
    %v113 = vlaneseq
    %v114 = vshrl.u32 %v113, 7
    %v115 = vsub.s32 0, %v114
    %v116 = vrot.slane %v86, %v115
    %v117 = vlaneseq
    %v118 = vshrl.u32 %v117, 7
    %v119 = vsub.s32 0, %v118
    %v120 = vrot.slane %v88, %v119
    %v121 = vld [vmem:[#allocation2] sm:$0xff]
    %v122 = vld [vmem:[#allocation2 + $0x8] sm:$0xff]
    %v123 = vcombine.low %v92, %v96
    %v124 = vcombine.low %v100, %v104
    %v126 = vunpack.c.l.s4 1983009808
    %v127 = vunpack.c.0.s8 %v126
    %v128 = vlaneseq
    %v129 = vshrl.u32 %v128, 7
    %v130 = vsub.s32 %v127, %v129
    %v131 = vrot.slane %v123, %v130
    %v133 = vunpack.c.l.s4 1983009808
    %v134 = vunpack.c.0.s8 %v133
    %v135 = vlaneseq
    %v136 = vshrl.u32 %v135, 7
    %v137 = vsub.s32 %v134, %v136
    %v138 = vrot.slane %v124, %v137
    %v139 = vcombine.low %v131, %v138
    %v140 = vcombine.low %v108, %v112
    %v141 = vcombine.low %v116, %v120
    %v143 = vunpack.c.l.s4 1983009808
    %v144 = vunpack.c.0.s8 %v143
    %v145 = vlaneseq
    %v146 = vshrl.u32 %v145, 7
    %v147 = vsub.s32 %v144, %v146
    %v148 = vrot.slane %v140, %v147
    %v150 = vunpack.c.l.s4 1983009808
    %v151 = vunpack.c.0.s8 %v150
    %v152 = vlaneseq
    %v153 = vshrl.u32 %v152, 7
    %v154 = vsub.s32 %v151, %v153
    %v155 = vrot.slane %v141, %v154
    %v156 = vcombine.low %v148, %v155
    %v159 = vadd.f32 %v121, %v139
    %v160 = vadd.f32 %v122, %v156
    %vm161 = vcmask 261120
    %162 = vst.msk [vmem:[#allocation7] sm:$0xff] %vm161, %v159
    %163 = vst.msk [vmem:[#allocation7 + $0x8] sm:$0xff] %vm161, %v160
    // Predicated region
    $region18: #{tpu_custom_call.1} parent=1 // pred_check
      _
    $region19: #{tpu_custom_call.1} parent=1 // pred_check_branch
      %165 = sbr.rel (0) target = $region21
    $region20: #{tpu_custom_call.1} parent=1 // pred_region
      %s167 = ssub.s32 256, 256
      %168 = vsyncadd [#allocation4], %s167
      %s169 = sshll.u32 [#allocation7], 4
      %s170 = int_to_ptr.vmem [resolvable:$true] %s169
      %175 = dma.vmem_to_hbm [thread:$0]  %s170, 256, %s2, [#allocation4], 128, 128, 8
    $region21: #{tpu_custom_call.1} parent=1 // pred_fallthru
      _
    // Predicated region
    $region22: #{tpu_custom_call.1} parent=1 // pred_check
      _
    $region23: #{tpu_custom_call.1} parent=1 // pred_check_branch
      %177 = sbr.rel (0) target = $region25
    $region24: #{tpu_custom_call.1} parent=1 // pred_region
      %178 = dma.done [#allocation4], 256
    $region25: #{tpu_custom_call.1} parent=1 // pred_fallthru
      _
    %179 = vsyncpa [#allocation3], 1
    %180 = vsyncpa [#allocation6], 1
    %181 = vsyncpa [#allocation4], 1

</llo_original>
